<compile_context>
chip_gen: v6e
topology: v6e:2x2x1
jax: 0.10.0
libtpu: 0.0.40
codegen_flags: <defaults>
</compile_context>

<pallas_src>
import functools

import jax
import jax.numpy as jnp
import numpy as np
from jax.experimental import pallas as pl
from jax.experimental.pallas import tpu as pltpu


# ----------------------------------------------------------------------------- helpers

def _vmem_capacity_bytes():
    """Physical VMEM of the local TPU; conservative fallback (v7x per-TC) if unavailable."""
    try:
        return int(pltpu.get_tpu_info().vmem_capacity_bytes)
    except Exception:
        return 64 * 1024 * 1024


def _pad_last(x, multiple):
    hw = x.shape[-1]
    pad = (-hw) % multiple
    if pad:
        x = jnp.pad(x, ((0, 0), (0, 0), (0, pad)))
    return x


# ----------------------------------------------------------------------------- fused single-slab path

def _dac_fused_kernel(obs_ref, refr_ref, w1_ref, w2_ref, out_ref, *, hw_obs, hw_ref, ch, eps):
    obs = obs_ref[...]     # (Nb, C, HWo_pad)
    refr = refr_ref[...]   # (Nb, C, HWr_pad)
    nb, c, _ = obs.shape

    # ---- referred per-channel stats from running sums (no centered slab temporaries).
    # Zero padding of the spatial dim is exact because the divisors use the true H*W.
    r_sum = jnp.sum(refr, axis=2, keepdims=True)                      # (Nb, C, 1)
    r_sumsq = jnp.sum(refr * refr, axis=2, keepdims=True)
    r_mean = r_sum * (1.0 / hw_ref)
    r_var = (r_sumsq - r_sum * r_mean) * (1.0 / (hw_ref - 1))
    r_std = jnp.sqrt(jnp.maximum(r_var, 0.0) + eps)

    # ---- observed per-channel stats.
    o_sum = jnp.sum(obs, axis=2, keepdims=True)
    o_sumsq = jnp.sum(obs * obs, axis=2, keepdims=True)
    o_mean = o_sum * (1.0 / hw_obs)
    o_var = (o_sumsq - o_sum * o_mean) * (1.0 / (hw_obs - 1))
    o_inv_std = jax.lax.rsqrt(jnp.maximum(o_var, 0.0) + eps)          # EUP rsqrt

    # ---- fused 1x1-conv bottleneck MLPs on the (C,1) referred stats.
    # w1: (C, 2*Ch) = [w_mean1^T | w_std1^T], w2: (C, 2*Ch) = [w_mean2 | w_std2].
    # Build a (Nb, C, 2*Ch) stat tile (mean in the first Ch lanes, std in the last Ch) with a
    # lane-index select -> one multiply + one sublane reduce per layer instead of two.
    w1 = w1_ref[...]
    w2 = w2_ref[...]
    lane = jax.lax.broadcasted_iota(jnp.int32, (nb, c, 2 * ch), 2)
    is_mean = lane < ch
    stat = jnp.where(is_mean, r_mean, r_std)                          # (Nb, C, 2*Ch)
    hidden = jnp.maximum(jnp.sum(w1[None] * stat, axis=1, keepdims=True), 0.0)  # (Nb, 1, 2*Ch)
    outs = w2[None] * hidden                                          # (Nb, C, 2*Ch)
    mean_out = jnp.sum(jnp.where(is_mean, outs, 0.0), axis=2, keepdims=True)    # (Nb, C, 1)
    std_out = jnp.sum(jnp.where(is_mean, 0.0, outs), axis=2, keepdims=True)     # (Nb, C, 1)

    # ---- fold everything into one per-channel scale/shift -> 1 mul + 1 add per element.
    scale = std_out * o_inv_std
    shift = mean_out - o_mean * scale
    out_ref[...] = (obs * scale + shift).astype(out_ref.dtype)


def _dac_fused(obs_flat, ref_flat, w_mean1, w_mean2, w_std1, w_std2, eps,
               hw_o, hw_r, phys_vmem):
    N, C, _ = obs_flat.shape
    ch = w_mean1.shape[0]

    # Lane-dense last dim (multiple of 128); padding is exact for the running-sum statistics.
    obs_p = _pad_last(obs_flat, 128)
    ref_p = _pad_last(ref_flat, 128)
    hw_o_p = obs_p.shape[-1]
    hw_r_p = ref_p.shape[-1]

    # ---- choose batch-elements-per-step Nb: ~2 MB slabs, keep >=2 (pref >=4) grid steps.
    per_batch_bytes = 4 * C * (2 * hw_o_p + hw_r_p)          # obs in + out + refr, one element
    target_step_bytes = 2 * 1024 * 1024
    divisors = [d for d in range(1, N + 1) if N % d == 0]

    def pick(min_steps):
        best = 1
        for d in divisors:
            if N // d >= min_steps and d * per_batch_bytes <= target_step_bytes:
                best = d
        return best

    nb = pick(min(N, 4))
    if nb * per_batch_bytes < (1 << 20):      # slabs still small -> trade step count for size
        nb = pick(min(N, 2))

    # ---- explicit VMEM budget with headroom under physical capacity.
    weights_bytes = 2 * 4 * C * 2 * ch
    needed = 2 * nb * per_batch_bytes + 4 * weights_bytes
    vmem_limit = int(min(int(0.9 * phys_vmem), max(2 * needed, 32 * 1024 * 1024)))

    # Fused bottleneck weights: one (C, 2*Ch) tile per layer, resident across all grid steps.
    w1_cat = jnp.concatenate([w_mean1.T, w_std1.T], axis=1)   # (C, 2*Ch)
    w2_cat = jnp.concatenate([w_mean2, w_std2], axis=1)       # (C, 2*Ch)

    kernel = functools.partial(_dac_fused_kernel, hw_obs=hw_o, hw_ref=hw_r, ch=ch, eps=eps)
    w_spec = pl.BlockSpec((C, 2 * ch), lambda n: (0, 0))

    cost = pl.CostEstimate(
        flops=int(5 * N * C * (hw_o + hw_r)),
        transcendentals=int(2 * N * C),
        bytes_accessed=int(4 * N * C * (2 * hw_o + hw_r)),
    )

    out_p = pl.pallas_call(
        kernel,
        out_shape=jax.ShapeDtypeStruct((N, C, hw_o_p), obs_flat.dtype),
        grid=(N // nb,),
        in_specs=[
            pl.BlockSpec((nb, C, hw_o_p), lambda n: (n, 0, 0)),   # observed slab
            pl.BlockSpec((nb, C, hw_r_p), lambda n: (n, 0, 0)),   # referred slab
            w_spec,                                               # [w_mean1^T | w_std1^T]
            w_spec,                                               # [w_mean2   | w_std2]
        ],
        out_specs=pl.BlockSpec((nb, C, hw_o_p), lambda n: (n, 0, 0)),
        compiler_params=pltpu.CompilerParams(
            dimension_semantics=("parallel",),       # batch steps shard across v7x's two TCs
            vmem_limit_bytes=vmem_limit,
        ),
        cost_estimate=cost,
    )(obs_p, ref_p, w1_cat, w2_cat)

    return out_p[..., :hw_o]


# ----------------------------------------------------------------------------- strip-tiled fallback (large HW / v7x VMEM)

def _stats_kernel(x_ref, sum_ref, sumsq_ref):
    @pl.when(pl.program_id(1) == 0)
    def _():
        sum_ref[...] = jnp.zeros_like(sum_ref)
        sumsq_ref[...] = jnp.zeros_like(sumsq_ref)

    x = x_ref[...].astype(jnp.float32)                 # (1, C, strip)
    sum_ref[...] += jnp.sum(x, axis=2, keepdims=True)
    sumsq_ref[...] += jnp.sum(x * x, axis=2, keepdims=True)


def _apply_kernel(obs_ref, scale_ref, shift_ref, out_ref):
    out_ref[...] = (obs_ref[...] * scale_ref[...] + shift_ref[...]).astype(out_ref.dtype)


def _reduce_sums(x_pad, strip, vmem_limit):
    """Per-(N,C) sum and sum-of-squares over the (zero-padded) flattened spatial dim."""
    N, C, hwp = x_pad.shape
    n_strips = hwp // strip
    sums, sumsqs = pl.pallas_call(
        _stats_kernel,
        out_shape=(jax.ShapeDtypeStruct((N, C, 1), jnp.float32),
                   jax.ShapeDtypeStruct((N, C, 1), jnp.float32)),
        grid=(N, n_strips),
        in_specs=[pl.BlockSpec((1, C, strip), lambda n, s: (n, 0, s))],
        out_specs=(pl.BlockSpec((1, C, 1), lambda n, s: (n, 0, 0)),
                   pl.BlockSpec((1, C, 1), lambda n, s: (n, 0, 0))),
        compiler_params=pltpu.CompilerParams(
            dimension_semantics=("parallel", "arbitrary"),   # strip axis is a reduction
            vmem_limit_bytes=vmem_limit,
        ),
    )(x_pad)
    return sums[..., 0], sumsqs[..., 0]


def _scale_shift_from_stats(o_sum, o_sumsq, r_sum, r_sumsq, hw_o, hw_r,
                            w_mean1, w_mean2, w_std1, w_std2, eps):
    """Tiny (N,C)-sized math: stats -> bottleneck MLPs -> per-channel scale/shift (plain XLA)."""
    o_mean = o_sum / hw_o
    o_var = (o_sumsq - o_sum * o_mean) / (hw_o - 1)
    r_mean = r_sum / hw_r
    r_var = (r_sumsq - r_sum * r_mean) / (hw_r - 1)
    r_std = jnp.sqrt(jnp.maximum(r_var, 0.0) + eps)

    mean_out = jnp.maximum(r_mean @ w_mean1.T, 0.0) @ w_mean2.T
    std_out = jnp.maximum(r_std @ w_std1.T, 0.0) @ w_std2.T

    scale = std_out * jax.lax.rsqrt(jnp.maximum(o_var, 0.0) + eps)
    shift = mean_out - o_mean * scale
    return scale[..., None].astype(jnp.float32), shift[..., None].astype(jnp.float32)


def _dac_strip_tiled(obs_flat, ref_flat, w_mean1, w_mean2, w_std1, w_std2, eps,
                     phys_vmem, strip_target_bytes):
    N, C, hw_o = obs_flat.shape
    _, _, hw_r = ref_flat.shape

    def pick_strip(hw):
        strip = max(128, (strip_target_bytes // (4 * C)) // 128 * 128)
        return min(strip, ((hw + 127) // 128) * 128)

    strip_o = pick_strip(hw_o)
    strip_r = pick_strip(hw_r)
    obs_p = _pad_last(obs_flat, strip_o)
    ref_p = _pad_last(ref_flat, strip_r)

    vmem_limit = int(min(int(0.9 * phys_vmem),
                         max(8 * 4 * C * max(strip_o, strip_r) + (1 << 20),
                             32 * 1024 * 1024)))

    # Pass 1: per-(N,C) running sums over HW strips (zero padding is exact).
    o_sum, o_sumsq = _reduce_sums(obs_p, strip_o, vmem_limit)
    r_sum, r_sumsq = _reduce_sums(ref_p, strip_r, vmem_limit)

    scale, shift = _scale_shift_from_stats(o_sum, o_sumsq, r_sum, r_sumsq, hw_o, hw_r,
                                           w_mean1, w_mean2, w_std1, w_std2, eps)

    # Pass 2: stream observed once more, one scale/shift per element.
    n_strips = obs_p.shape[-1] // strip_o
    out_p = pl.pallas_call(
        _apply_kernel,
        out_shape=jax.ShapeDtypeStruct(obs_p.shape, obs_flat.dtype),
        grid=(N, n_strips),
        in_specs=[pl.BlockSpec((1, C, strip_o), lambda n, s: (n, 0, s)),
                  pl.BlockSpec((1, C, 1), lambda n, s: (n, 0, 0)),
                  pl.BlockSpec((1, C, 1), lambda n, s: (n, 0, 0))],
        out_specs=pl.BlockSpec((1, C, strip_o), lambda n, s: (n, 0, s)),
        compiler_params=pltpu.CompilerParams(
            dimension_semantics=("parallel", "parallel"),
            vmem_limit_bytes=vmem_limit,
        ),
    )(obs_p, scale, shift)

    return out_p[..., :hw_o]


# ----------------------------------------------------------------------------- public wrapper

def dac_forward(observed, referred, w_mean1, w_mean2, w_std1, w_std2, eps=1e-5,
                *, force_strip_tiled=False, strip_target_bytes=2 * 1024 * 1024):
    """observed/referred: (N, C, H, W) float32 (spatial sizes may differ).
    w_mean1/w_std1: (C//16, C); w_mean2/w_std2: (C, C//16). Returns (N, C, H, W)."""
    N, C, H, W = observed.shape
    Nr, Cr, Hr, Wr = referred.shape
    assert (N, C) == (Nr, Cr)
    hw_o = H * W
    hw_r = Hr * Wr
    assert hw_o > 1 and hw_r > 1, "unbiased variance needs more than one spatial element"

    # Free reshapes of contiguous NCHW tensors -> (N, C, H*W).
    obs_flat = observed.reshape(N, C, hw_o)
    ref_flat = referred.reshape(N, C, hw_r)

    phys_vmem = _vmem_capacity_bytes()

    # Would one batch element (double-buffered obs + refr + out slabs) fit comfortably in VMEM?
    hw_o_p = hw_o + ((-hw_o) % 128)
    hw_r_p = hw_r + ((-hw_r) % 128)
    fused_footprint = 2 * 4 * C * (2 * hw_o_p + hw_r_p)
    use_strip = force_strip_tiled or (fused_footprint > int(0.7 * phys_vmem))

    if use_strip:
        out_flat = _dac_strip_tiled(obs_flat, ref_flat, w_mean1, w_mean2, w_std1, w_std2,
                                    eps, phys_vmem, strip_target_bytes)
    else:
        out_flat = _dac_fused(obs_flat, ref_flat, w_mean1, w_mean2, w_std1, w_std2,
                              eps, hw_o, hw_r, phys_vmem)

    return out_flat.reshape(N, C, H, W)


# ----------------------------------------------------------------------------- pure-JAX reference

def _dac_reference(observed, referred, w_mean1, w_mean2, w_std1, w_std2, eps=1e-5):
    """Mirrors the PyTorch module."""
    def calc_mean_std(feat):
        n, c = feat.shape[:2]
        flat = feat.reshape(n, c, -1)
        var = jnp.var(flat, axis=2, ddof=1) + eps      # torch .var(dim) default unbiased=True
        std = jnp.sqrt(var).reshape(n, c, 1, 1)
        mean = jnp.mean(flat, axis=2).reshape(n, c, 1, 1)
        return mean, std

    r_mean, r_std = calc_mean_std(referred)
    o_mean, o_std = calc_mean_std(observed)
    normalized = (observed - o_mean) / o_std

    def bottleneck(x, w1, w2):
        v = x[:, :, 0, 0]                        # (N, C)
        h = jnp.maximum(v @ w1.T, 0.0)           # (N, Ch)
        o = h @ w2.T                             # (N, C)
        return o[:, :, None, None]

    rm = bottleneck(r_mean, w_mean1, w_mean2)
    rs = bottleneck(r_std, w_std1, w_std2)
    return normalized * rs + rm


if __name__ == "__main__":
    key = jax.random.PRNGKey(0)
    k_obs, k_ref, k1, k2, k3, k4 = jax.random.split(key, 6)

    # n_channels must be >= 16 for the C//16 bottleneck; use C=32 -> hidden=2.
    N, C, H, W = 2, 32, 16, 16
    CH = C // 16

    observed = jax.random.normal(k_obs, (N, C, H, W), dtype=jnp.float32)
    referred = jax.random.normal(k_ref, (N, C, H, W), dtype=jnp.float32)

    # 1x1-conv weights (bias=False in the module); deterministic PyTorch-style uniform init.
    b1 = 1.0 / np.sqrt(C)
    b2 = 1.0 / np.sqrt(CH)
    w_mean1 = jax.random.uniform(k1, (CH, C), jnp.float32, -b1, b1)
    w_mean2 = jax.random.uniform(k2, (C, CH), jnp.float32, -b2, b2)
    w_std1 = jax.random.uniform(k3, (CH, C), jnp.float32, -b1, b1)
    w_std2 = jax.random.uniform(k4, (C, CH), jnp.float32, -b2, b2)

    ref = jax.block_until_ready(
        _dac_reference(observed, referred, w_mean1, w_mean2, w_std1, w_std2))

    # Fused single-slab path (default at these shapes).
    out = jax.block_until_ready(
        dac_forward(observed, referred, w_mean1, w_mean2, w_std1, w_std2))
    np.testing.assert_allclose(np.asarray(out), np.asarray(ref), rtol=2e-5, atol=2e-5)

    # Strip-tiled two-pass fallback (forced, with small strips so the HW reduction runs >1 step).
    out_strip = jax.block_until_ready(
        dac_forward(observed, referred, w_mean1, w_mean2, w_std1, w_std2,
                    force_strip_tiled=True, strip_target_bytes=4 * C * 128))
    np.testing.assert_allclose(np.asarray(out_strip), np.asarray(ref), rtol=2e-5, atol=2e-5)

    print("KERNEL_OK")
</pallas_src>

<mosaic_0001>
module attributes {stable_mosaic.version = 11 : i64} {
  func.func @_dac_fused_kernel(%arg0: i32, %arg1: memref<1x32x256xf32, #tpu.memory_space<vmem>>, %arg2: memref<1x32x256xf32, #tpu.memory_space<vmem>>, %arg3: memref<32x4xf32, #tpu.memory_space<vmem>>, %arg4: memref<32x4xf32, #tpu.memory_space<vmem>>, %arg5: memref<1x32x256xf32, #tpu.memory_space<vmem>>) attributes {dimension_semantics = [#tpu.dimension_semantics<parallel>], iteration_bounds = array<i64: 2>, scalar_prefetch = 0 : i64, scratch_operands = 0 : i64, tpu.core_type = #tpu.core_type<tc>, window_params = [{transform_indices = @transform_0, window_bounds = array<i64: 1, 32, 256>}, {transform_indices = @transform_1, window_bounds = array<i64: 1, 32, 256>}, {pipeline_mode = #tpu.pipeline_mode<synchronous>, transform_indices = @transform_2, window_bounds = array<i64: 32, 4>}, {pipeline_mode = #tpu.pipeline_mode<synchronous>, transform_indices = @transform_3, window_bounds = array<i64: 32, 4>}, {transform_indices = @transform_4, window_bounds = array<i64: 1, 32, 256>}]} {
    %c0 = arith.constant 0 : index
    %c0_0 = arith.constant 0 : index
    %c0_1 = arith.constant 0 : index
    %0 = vector.load %arg1[%c0, %c0_0, %c0_1] : memref<1x32x256xf32, #tpu.memory_space<vmem>>, vector<1x32x256xf32>
    %c0_2 = arith.constant 0 : index
    %c0_3 = arith.constant 0 : index
    %c0_4 = arith.constant 0 : index
    %1 = vector.load %arg2[%c0_2, %c0_3, %c0_4] : memref<1x32x256xf32, #tpu.memory_space<vmem>>, vector<1x32x256xf32>
    %cst = arith.constant dense<0.000000e+00> : vector<1x32xf32>
    %2 = vector.multi_reduction <add>, %1, %cst [2] : vector<1x32x256xf32> to vector<1x32xf32>
    %3 = vector.shape_cast %2 : vector<1x32xf32> to vector<1x32x1xf32>
    %4 = arith.mulf %1, %1 : vector<1x32x256xf32>
    %cst_5 = arith.constant dense<0.000000e+00> : vector<1x32xf32>
    %5 = vector.multi_reduction <add>, %4, %cst_5 [2] : vector<1x32x256xf32> to vector<1x32xf32>
    %6 = vector.shape_cast %5 : vector<1x32xf32> to vector<1x32x1xf32>
    %cst_6 = arith.constant 3.906250e-03 : f32
    %7 = vector.broadcast %cst_6 : f32 to vector<1x32x1xf32>
    %8 = arith.mulf %3, %7 : vector<1x32x1xf32>
    %9 = arith.mulf %3, %8 : vector<1x32x1xf32>
    %10 = arith.subf %6, %9 : vector<1x32x1xf32>
    %cst_7 = arith.constant 0.00392156886 : f32
    %11 = vector.broadcast %cst_7 : f32 to vector<1x32x1xf32>
    %12 = arith.mulf %10, %11 : vector<1x32x1xf32>
    %cst_8 = arith.constant 0.000000e+00 : f32
    %13 = vector.broadcast %cst_8 : f32 to vector<1x32x1xf32>
    %14 = arith.maximumf %12, %13 : vector<1x32x1xf32>
    %cst_9 = arith.constant 9.99999974E-6 : f32
    %15 = vector.broadcast %cst_9 : f32 to vector<1x32x1xf32>
    %16 = arith.addf %14, %15 : vector<1x32x1xf32>
    %17 = math.sqrt %16 : vector<1x32x1xf32>
    %cst_10 = arith.constant dense<0.000000e+00> : vector<1x32xf32>
    %18 = vector.multi_reduction <add>, %0, %cst_10 [2] : vector<1x32x256xf32> to vector<1x32xf32>
    %19 = vector.shape_cast %18 : vector<1x32xf32> to vector<1x32x1xf32>
    %20 = arith.mulf %0, %0 : vector<1x32x256xf32>
    %cst_11 = arith.constant dense<0.000000e+00> : vector<1x32xf32>
    %21 = vector.multi_reduction <add>, %20, %cst_11 [2] : vector<1x32x256xf32> to vector<1x32xf32>
    %22 = vector.shape_cast %21 : vector<1x32xf32> to vector<1x32x1xf32>
    %cst_12 = arith.constant 3.906250e-03 : f32
    %23 = vector.broadcast %cst_12 : f32 to vector<1x32x1xf32>
    %24 = arith.mulf %19, %23 : vector<1x32x1xf32>
    %25 = arith.mulf %19, %24 : vector<1x32x1xf32>
    %26 = arith.subf %22, %25 : vector<1x32x1xf32>
    %cst_13 = arith.constant 0.00392156886 : f32
    %27 = vector.broadcast %cst_13 : f32 to vector<1x32x1xf32>
    %28 = arith.mulf %26, %27 : vector<1x32x1xf32>
    %cst_14 = arith.constant 0.000000e+00 : f32
    %29 = vector.broadcast %cst_14 : f32 to vector<1x32x1xf32>
    %30 = arith.maximumf %28, %29 : vector<1x32x1xf32>
    %cst_15 = arith.constant 9.99999974E-6 : f32
    %31 = vector.broadcast %cst_15 : f32 to vector<1x32x1xf32>
    %32 = arith.addf %30, %31 : vector<1x32x1xf32>
    %33 = math.rsqrt %32 : vector<1x32x1xf32>
    %c0_16 = arith.constant 0 : index
    %c0_17 = arith.constant 0 : index
    %34 = vector.load %arg3[%c0_16, %c0_17] : memref<32x4xf32, #tpu.memory_space<vmem>>, vector<32x4xf32>
    %c0_18 = arith.constant 0 : index
    %c0_19 = arith.constant 0 : index
    %35 = vector.load %arg4[%c0_18, %c0_19] : memref<32x4xf32, #tpu.memory_space<vmem>>, vector<32x4xf32>
    %36 = tpu.iota {dimensions = array<i32: 2>} : vector<1x32x4xi32>
    %c2_i32 = arith.constant 2 : i32
    %37 = vector.broadcast %c2_i32 : i32 to vector<1x32x4xi32>
    %38 = arith.cmpi slt, %36, %37 : vector<1x32x4xi32>
    %39 = vector.shape_cast %8 : vector<1x32x1xf32> to vector<1x32x1xf32>
    %40 = vector.broadcast %39 : vector<1x32x1xf32> to vector<1x32x4xf32>
    %41 = vector.shape_cast %17 : vector<1x32x1xf32> to vector<1x32x1xf32>
    %42 = vector.broadcast %41 : vector<1x32x1xf32> to vector<1x32x4xf32>
    %43 = arith.select %38, %40, %42 : vector<1x32x4xi1>, vector<1x32x4xf32>
    %44 = vector.shape_cast %34 : vector<32x4xf32> to vector<1x32x4xf32>
    %45 = arith.mulf %44, %43 : vector<1x32x4xf32>
    %cst_20 = arith.constant dense<0.000000e+00> : vector<1x4xf32>
    %46 = vector.multi_reduction <add>, %45, %cst_20 [1] : vector<1x32x4xf32> to vector<1x4xf32>
    %47 = vector.shape_cast %46 : vector<1x4xf32> to vector<1x1x4xf32>
    %cst_21 = arith.constant 0.000000e+00 : f32
    %48 = vector.broadcast %cst_21 : f32 to vector<1x1x4xf32>
    %49 = arith.maximumf %47, %48 : vector<1x1x4xf32>
    %50 = vector.shape_cast %35 : vector<32x4xf32> to vector<1x32x4xf32>
    %51 = vector.broadcast %49 : vector<1x1x4xf32> to vector<1x32x4xf32>
    %52 = arith.mulf %50, %51 : vector<1x32x4xf32>
    %cst_22 = arith.constant 0.000000e+00 : f32
    %53 = vector.broadcast %cst_22 : f32 to vector<1x32x4xf32>
    %54 = arith.select %38, %52, %53 : vector<1x32x4xi1>, vector<1x32x4xf32>
    %cst_23 = arith.constant dense<0.000000e+00> : vector<1x32xf32>
    %55 = vector.multi_reduction <add>, %54, %cst_23 [2] : vector<1x32x4xf32> to vector<1x32xf32>
    %56 = vector.shape_cast %55 : vector<1x32xf32> to vector<1x32x1xf32>
    %cst_24 = arith.constant 0.000000e+00 : f32
    %57 = vector.broadcast %cst_24 : f32 to vector<1x32x4xf32>
    %58 = arith.select %38, %57, %52 : vector<1x32x4xi1>, vector<1x32x4xf32>
    %cst_25 = arith.constant dense<0.000000e+00> : vector<1x32xf32>
    %59 = vector.multi_reduction <add>, %58, %cst_25 [2] : vector<1x32x4xf32> to vector<1x32xf32>
    %60 = vector.shape_cast %59 : vector<1x32xf32> to vector<1x32x1xf32>
    %61 = arith.mulf %60, %33 : vector<1x32x1xf32>
    %62 = arith.mulf %24, %61 : vector<1x32x1xf32>
    %63 = arith.subf %56, %62 : vector<1x32x1xf32>
    %64 = vector.broadcast %61 : vector<1x32x1xf32> to vector<1x32x256xf32>
    %65 = arith.mulf %0, %64 : vector<1x32x256xf32>
    %66 = vector.broadcast %63 : vector<1x32x1xf32> to vector<1x32x256xf32>
    %67 = arith.addf %65, %66 : vector<1x32x256xf32>
    %c0_26 = arith.constant 0 : index
    %c0_27 = arith.constant 0 : index
    %c0_28 = arith.constant 0 : index
    %68 = vector.load %arg5[%c0_26, %c0_27, %c0_28] : memref<1x32x256xf32, #tpu.memory_space<vmem>>, vector<1x32x256xf32>
    tpu.vector_store %arg5[%c0_26, %c0_27, %c0_28], %67 {strides = array<i32>} : memref<1x32x256xf32, #tpu.memory_space<vmem>>, vector<1x32x256xf32>,
    return
  }
  func.func @transform_0(%arg0: i32) -> (i32, i32, i32) {
    %c0_i32 = arith.constant 0 : i32
    %c0_i32_0 = arith.constant 0 : i32
    %c0_i32_1 = arith.constant 0 : i32
    return %arg0, %c0_i32, %c0_i32_0 : i32, i32, i32
  }
  func.func @transform_1(%arg0: i32) -> (i32, i32, i32) {
    %c0_i32 = arith.constant 0 : i32
    %c0_i32_0 = arith.constant 0 : i32
    %c0_i32_1 = arith.constant 0 : i32
    return %arg0, %c0_i32, %c0_i32_0 : i32, i32, i32
  }
  func.func @transform_2(%arg0: i32) -> (i32, i32) {
    %c0_i32 = arith.constant 0 : i32
    %c0_i32_0 = arith.constant 0 : i32
    %c0_i32_1 = arith.constant 0 : i32
    return %c0_i32, %c0_i32_0 : i32, i32
  }
  func.func @transform_3(%arg0: i32) -> (i32, i32) {
    %c0_i32 = arith.constant 0 : i32
    %c0_i32_0 = arith.constant 0 : i32
    %c0_i32_1 = arith.constant 0 : i32
    return %c0_i32, %c0_i32_0 : i32, i32
  }
  func.func @transform_4(%arg0: i32) -> (i32, i32, i32) {
    %c0_i32 = arith.constant 0 : i32
    %c0_i32_0 = arith.constant 0 : i32
    %c0_i32_1 = arith.constant 0 : i32
    return %arg0, %c0_i32, %c0_i32_0 : i32, i32, i32
  }
}

</mosaic_0001>

<llo_original>
// kernel: tpu_custom_call.1
$region0: #{tpu_custom_call.1}
  #allocation0 [shape = 'u32[]', space=smem, size = 0x4, offset = 0x4, fixed_abs, tag = 'smem constant byte address 0x4 - core index']
  #allocation1 [shape = 'u32[144,128]{1,0:T(1,128)}', space=vmem, size = 0x12000, scoped, tag = 'internal scratch']
  %s0 = inlined_call_operand.hbm [shape: f32[2,32,256], index: 0, kind: input, shape index: {}]
  %s1 = inlined_call_operand.hbm [shape: f32[2,32,256], index: 1, kind: input, shape index: {}]
  %s2 = inlined_call_operand.vmem [shape: f32[32,4], index: 2, kind: input, shape index: {}]
  %s3 = inlined_call_operand.vmem [shape: f32[32,4], index: 3, kind: input, shape index: {}]
  %s4 = inlined_call_operand.hbm [shape: f32[2,32,256], index: 4, kind: output, shape index: {}]
  %s5 = sld [smem:[#allocation0]]
  $region57: #{tpu_custom_call.1} parent=0
    _
  %s7 = ssub.s32 1, %s5
  %s8 = scalar_select 0, %s7, %s5
  $region1: #{tpu_custom_call.1} parent=0
    #allocation2 [shape = 'u8[65536]{0}', space=vmem, size = 0x10000, scoped, tag = 'input window, operand 0']
    #allocation3 [shape = 's32[2]{0}', space=sflag, size = 0x8, scoped, tag = 'scoped memory for tpu_custom_call.1']
    #allocation4 [shape = 's32[2]{0}', space=sflag, size = 0x8, scoped, tag = 'scoped memory for tpu_custom_call.1']
    #allocation5 [shape = 'u8[65536]{0}', space=vmem, size = 0x10000, scoped, tag = 'input window, operand 1']
    #allocation6 [shape = 's32[2]{0}', space=sflag, size = 0x8, scoped, tag = 'scoped memory for tpu_custom_call.1']
    #allocation7 [shape = 'u8[65536]{0}', space=vmem, size = 0x10000, scoped, tag = 'output window, operand 0']
    %9 = vsyncpa [#allocation3], 0
    %s10 = scalar_lea.sflag [#allocation3], 1
    %11 = vsyncpa %s10, 0
    %12 = vsyncpa [#allocation6], 0
    %s13 = scalar_lea.sflag [#allocation6], 1
    %14 = vsyncpa %s13, 0
    %15 = vsyncpa [#allocation4], 0
    %s16 = scalar_lea.sflag [#allocation4], 1
    %17 = vsyncpa %s16, 0
    loop: start=0, step=1, limit=4
    $region2: #{tpu_custom_call.1} parent=1 // loop_pre_header
      _
    $region3: #{tpu_custom_call.1} parent=1 // loop_header
      %s19 = sphi 0, %s23
      %p20 = scmp.ge.s32.totalorder %s19, 4
      %s29 = sphi 0, %s31
      %s32 = sphi 0, %s29
      %s33 = sphi 0, %s32
      %s49 = sphi 0, %s33
      %s55 = sphi 0, %s57
      %s58 = sphi 0, %s55
      %s59 = sphi 0, %s58
      %s75 = sphi 0, %s59
      %s79 = sphi 0, %s79
      %s81 = sphi 0, %s79
      %s82 = sphi 0, %s81
      %s96 = sphi 0, %s82
      %s100 = sphi 0, %s100
      %s102 = sphi 0, %s100
      %s103 = sphi 0, %s102
      %s117 = sphi 0, %s103
      %s123 = sphi 0, %s125
      %s126 = sphi 0, %s123
      %s127 = sphi 0, %s126
      %s143 = sphi 0, %s127
    $region4: #{tpu_custom_call.1} parent=1 // loop_header_branch
      %22 = sbr.rel (%p20) target = $region8
    $region5: #{tpu_custom_call.1} parent=1 // loop_body
      %s24 = ssub.s32 %s19, 1
      %s25 = ssub.s32 %s19, 2
      %s26 = sadd.s32 %s19, 1
      %s27 = ssub.s32 %s19, %s26
      %p28 = scmp.eq.s32.totalorder %s27, 0
      %s30 = sadd.s32 %s29, 1
      %s31 = scalar_select %p28, %s29, %s30
      %p34 = pneg %p28
      %p35 = scmp.eq.s32.totalorder %s19, 1
      %p36 = por %p34, %p35
      %p37 = scmp.ne.s32.totalorder %s29, %s32
      %p38 = scmp.eq.s32.totalorder %s19, 0
      %p39 = por %p37, %p38
      %p40 = scmp.ne.s32.totalorder %s29, %s32
      %p41 = scmp.eq.s32.totalorder %s24, 1
      %p42 = por %p40, %p41
      %p43 = scmp.ne.s32.totalorder %s32, %s33
      %p44 = scmp.eq.s32.totalorder %s24, 0
      %p45 = por %p43, %p44
      %p46 = scmp.ne.s32.totalorder %s32, %s33
      %p47 = scmp.eq.s32.totalorder %s25, 1
      %p48 = por %p46, %p47
      %p50 = scmp.ne.s32.totalorder %s33, %s49
      %p51 = scmp.eq.s32.totalorder %s25, 0
      %p52 = por %p50, %p51
      %s53 = ssub.s32 %s19, %s26
      %p54 = scmp.eq.s32.totalorder %s53, 0
      %s56 = sadd.s32 %s55, 1
      %s57 = scalar_select %p54, %s55, %s56
      %p60 = pneg %p54
      %p61 = scmp.eq.s32.totalorder %s19, 1
      %p62 = por %p60, %p61
      %p63 = scmp.ne.s32.totalorder %s55, %s58
      %p64 = scmp.eq.s32.totalorder %s19, 0
      %p65 = por %p63, %p64
      %p66 = scmp.ne.s32.totalorder %s55, %s58
      %p67 = scmp.eq.s32.totalorder %s24, 1
      %p68 = por %p66, %p67
      %p69 = scmp.ne.s32.totalorder %s58, %s59
      %p70 = scmp.eq.s32.totalorder %s24, 0
      %p71 = por %p69, %p70
      %p72 = scmp.ne.s32.totalorder %s58, %s59
      %p73 = scmp.eq.s32.totalorder %s25, 1
      %p74 = por %p72, %p73
      %p76 = scmp.ne.s32.totalorder %s59, %s75
      %p77 = scmp.eq.s32.totalorder %s25, 0
      %p78 = por %p76, %p77
      %s80 = sadd.s32 %s79, 1
      %p83 = scmp.eq.s32.totalorder %s19, 1
      %p84 = scmp.ne.s32.totalorder %s79, %s81
      %p85 = scmp.eq.s32.totalorder %s19, 0
      %p86 = por %p84, %p85
      %p87 = scmp.ne.s32.totalorder %s79, %s81
      %p88 = scmp.eq.s32.totalorder %s24, 1
      %p89 = por %p87, %p88
      %p90 = scmp.ne.s32.totalorder %s81, %s82
      %p91 = scmp.eq.s32.totalorder %s24, 0
      %p92 = por %p90, %p91
      %p93 = scmp.ne.s32.totalorder %s81, %s82
      %p94 = scmp.eq.s32.totalorder %s25, 1
      %p95 = por %p93, %p94
      %p97 = scmp.ne.s32.totalorder %s82, %s96
      %p98 = scmp.eq.s32.totalorder %s25, 0
      %p99 = por %p97, %p98
      %s101 = sadd.s32 %s100, 1
      %p104 = scmp.eq.s32.totalorder %s19, 1
      %p105 = scmp.ne.s32.totalorder %s100, %s102
      %p106 = scmp.eq.s32.totalorder %s19, 0
      %p107 = por %p105, %p106
      %p108 = scmp.ne.s32.totalorder %s100, %s102
      %p109 = scmp.eq.s32.totalorder %s24, 1
      %p110 = por %p108, %p109
      %p111 = scmp.ne.s32.totalorder %s102, %s103
      %p112 = scmp.eq.s32.totalorder %s24, 0
      %p113 = por %p111, %p112
      %p114 = scmp.ne.s32.totalorder %s102, %s103
      %p115 = scmp.eq.s32.totalorder %s25, 1
      %p116 = por %p114, %p115
      %p118 = scmp.ne.s32.totalorder %s103, %s117
      %p119 = scmp.eq.s32.totalorder %s25, 0
      %p120 = por %p118, %p119
      %s121 = ssub.s32 %s19, %s26
      %p122 = scmp.eq.s32.totalorder %s121, 0
      %s124 = sadd.s32 %s123, 1
      %s125 = scalar_select %p122, %s123, %s124
      %p128 = pneg %p122
      %p129 = scmp.eq.s32.totalorder %s19, 1
      %p130 = por %p128, %p129
      %p131 = scmp.ne.s32.totalorder %s123, %s126
      %p132 = scmp.eq.s32.totalorder %s19, 0
      %p133 = por %p131, %p132
      %p134 = scmp.ne.s32.totalorder %s123, %s126
      %p135 = scmp.eq.s32.totalorder %s24, 1
      %p136 = por %p134, %p135
      %p137 = scmp.ne.s32.totalorder %s126, %s127
      %p138 = scmp.eq.s32.totalorder %s24, 0
      %p139 = por %p137, %p138
      %p140 = scmp.ne.s32.totalorder %s126, %s127
      %p141 = scmp.eq.s32.totalorder %s25, 1
      %p142 = por %p140, %p141
      %p144 = scmp.ne.s32.totalorder %s127, %s143
      %p145 = scmp.eq.s32.totalorder %s25, 0
      %p146 = por %p144, %p145
      %p147 = scmp.le.s32.totalorder 1, %s19
      %p148 = scmp.lt.s32.totalorder %s19, 3
      %p149 = pnand %p147, %p148
      %p150 = pneg %p149
      // Predicated region
      $region9: #{tpu_custom_call.1} parent=5 // pred_check
        _
      $region10: #{tpu_custom_call.1} parent=5 // pred_check_branch
        %152 = sbr.rel (%p149) target = $region12
      $region11: #{tpu_custom_call.1} parent=5 // pred_region
        %s153 = ssub.s32 %s19, 1
        // Predicated region
        $region13: #{tpu_custom_call.1} parent=11 // pred_check
          %p154 = pneg %p92
        $region14: #{tpu_custom_call.1} parent=11 // pred_check_branch
          %156 = sbr.rel (%p154) target = $region16
        $region15: #{tpu_custom_call.1} parent=11 // pred_region
          _
        $region16: #{tpu_custom_call.1} parent=11 // pred_fallthru
          _
        // Predicated region
        $region17: #{tpu_custom_call.1} parent=11 // pred_check
          %p157 = pneg %p113
        $region18: #{tpu_custom_call.1} parent=11 // pred_check_branch
          %159 = sbr.rel (%p157) target = $region20
        $region19: #{tpu_custom_call.1} parent=11 // pred_region
          _
        $region20: #{tpu_custom_call.1} parent=11 // pred_fallthru
          _
      $region12: #{tpu_custom_call.1} parent=5 // pred_fallthru
        _
      %p160 = scmp.lt.s32.totalorder %s19, 2
      // Predicated region
      $region21: #{tpu_custom_call.1} parent=5 // pred_check
        %p161 = pneg %p160
      $region22: #{tpu_custom_call.1} parent=5 // pred_check_branch
        %163 = sbr.rel (%p161) target = $region24
      $region23: #{tpu_custom_call.1} parent=5 // pred_region
        // Predicated region
        $region25: #{tpu_custom_call.1} parent=23 // pred_check
          %p164 = pneg %p39
        $region26: #{tpu_custom_call.1} parent=23 // pred_check_branch
          %166 = sbr.rel (%p164) target = $region28
        $region27: #{tpu_custom_call.1} parent=23 // pred_region
          %s167 = sand.u32 %s29, 1
          %s168 = scalar_lea.sflag [#allocation3], %s167
          %s169 = sand.u32 %s29, 1
          %s170 = smul.addr %s169, 64
          %s171 = scalar_lea.vmem [#allocation2], %s170
          %s173 = ssub.s32 1024, 1024
          %174 = vsyncadd %s168, %s173
          %s175 = smul.addr %s19, 8
          %s176 = smul.addr %s175, 128
          %s177 = scalar_lea.hbm %s0, %s176
          %s178 = sshll.u32 %s171, 4
          %s179 = int_to_ptr.vmem [resolvable:$true] %s178
          %184 = dma.hbm_to_vmem [thread:$0]  %s177, 1024, %s179, %s168, 256, 256, 16
        $region28: #{tpu_custom_call.1} parent=23 // pred_fallthru
          _
        // Predicated region
        $region29: #{tpu_custom_call.1} parent=23 // pred_check
          %p185 = pneg %p65
        $region30: #{tpu_custom_call.1} parent=23 // pred_check_branch
          %187 = sbr.rel (%p185) target = $region32
        $region31: #{tpu_custom_call.1} parent=23 // pred_region
          %s188 = sand.u32 %s55, 1
          %s189 = scalar_lea.sflag [#allocation6], %s188
          %s190 = sand.u32 %s55, 1
          %s191 = smul.addr %s190, 64
          %s192 = scalar_lea.vmem [#allocation5], %s191
          %s194 = ssub.s32 1024, 1024
          %195 = vsyncadd %s189, %s194
          %s196 = smul.addr %s19, 8
          %s197 = smul.addr %s196, 128
          %s198 = scalar_lea.hbm %s1, %s197
          %s199 = sshll.u32 %s192, 4
          %s200 = int_to_ptr.vmem [resolvable:$true] %s199
          %205 = dma.hbm_to_vmem [thread:$0]  %s198, 1024, %s200, %s189, 256, 256, 16
        $region32: #{tpu_custom_call.1} parent=23 // pred_fallthru
          _
      $region24: #{tpu_custom_call.1} parent=5 // pred_fallthru
        _
      %p206 = scmp.le.s32.totalorder 1, %s19
      %p207 = scmp.lt.s32.totalorder %s19, 3
      %p208 = pnand %p206, %p207
      %p209 = pneg %p208
      // Predicated region
      $region33: #{tpu_custom_call.1} parent=5 // pred_check
        _
      $region34: #{tpu_custom_call.1} parent=5 // pred_check_branch
        %211 = sbr.rel (%p208) target = $region36
      $region35: #{tpu_custom_call.1} parent=5 // pred_region
        %s212 = ssub.s32 %s19, 1
        %s213 = sand.u32 %s32, 1
        %s214 = scalar_lea.sflag [#allocation3], %s213
        %s215 = sand.u32 %s32, 1
        %s216 = smul.addr %s215, 64
        %s217 = scalar_lea.vmem [#allocation2], %s216
        // Predicated region
        $region37: #{tpu_custom_call.1} parent=35 // pred_check
          %p218 = pneg %p45
        $region38: #{tpu_custom_call.1} parent=35 // pred_check_branch
          %220 = sbr.rel (%p218) target = $region40
        $region39: #{tpu_custom_call.1} parent=35 // pred_region
          %221 = dma.done %s214, 1024
        $region40: #{tpu_custom_call.1} parent=35 // pred_fallthru
          _
        %s222 = sand.u32 %s58, 1
        %s223 = scalar_lea.sflag [#allocation6], %s222
        %s224 = sand.u32 %s58, 1
        %s225 = smul.addr %s224, 64
        %s226 = scalar_lea.vmem [#allocation5], %s225
        // Predicated region
        $region41: #{tpu_custom_call.1} parent=35 // pred_check
          %p227 = pneg %p71
        $region42: #{tpu_custom_call.1} parent=35 // pred_check_branch
          %229 = sbr.rel (%p227) target = $region44
        $region43: #{tpu_custom_call.1} parent=35 // pred_region
          %230 = dma.done %s223, 1024
        $region44: #{tpu_custom_call.1} parent=35 // pred_fallthru
          _
        %s231 = sand.u32 %s32, 1
        %s232 = scalar_lea.sflag [#allocation3], %s231
        %s233 = sand.u32 %s32, 1
        %s234 = smul.addr %s233, 64
        %s235 = scalar_lea.vmem [#allocation2], %s234
        %p236 = pneg %p45
        %p237 = pneg %p42
        %s238 = sand.u32 %s58, 1
        %s239 = scalar_lea.sflag [#allocation6], %s238
        %s240 = sand.u32 %s58, 1
        %s241 = smul.addr %s240, 64
        %s242 = scalar_lea.vmem [#allocation5], %s241
        %p243 = pneg %p71
        %p244 = pneg %p68
        %p245 = pneg %p92
        %p246 = pneg %p89
        %p247 = pneg %p113
        %p248 = pneg %p110
        %p249 = pneg %p139
        %p250 = pneg %p136
        %s251 = sand.u32 %s126, 1
        %s252 = scalar_lea.sflag [#allocation4], %s251
        %s253 = sand.u32 %s126, 1
        %s254 = smul.addr %s253, 64
        %s255 = scalar_lea.vmem [#allocation7], %s254
        %v256 = vld [vmem:[%s217] sm:$0xff]
        %v257 = vld [vmem:[%s217 + $0x8] sm:$0xff]
        %v258 = vld [vmem:[%s217 + $0x10] sm:$0xff]
        %v259 = vld [vmem:[%s217 + $0x18] sm:$0xff]
        %v260 = vld [vmem:[%s217 + $0x20] sm:$0xff]
        %v261 = vld [vmem:[%s217 + $0x28] sm:$0xff]
        %v262 = vld [vmem:[%s217 + $0x30] sm:$0xff]
        %v263 = vld [vmem:[%s217 + $0x38] sm:$0xff]
        %v264 = vld [vmem:[%s226] sm:$0xff]
        %v265 = vld [vmem:[%s226 + $0x8] sm:$0xff]
        %v266 = vld [vmem:[%s226 + $0x10] sm:$0xff]
        %v267 = vld [vmem:[%s226 + $0x18] sm:$0xff]
        %v268 = vld [vmem:[%s226 + $0x20] sm:$0xff]
        %v269 = vld [vmem:[%s226 + $0x28] sm:$0xff]
        %v270 = vld [vmem:[%s226 + $0x30] sm:$0xff]
        %v271 = vld [vmem:[%s226 + $0x38] sm:$0xff]
        %v272 = vadd.f32 %v264, %v265
        %273 = vadd.xlane.f32.xlu0 %v272
        %v274 = vpop.xlane.xlu0 %273
        %v275 = vadd.f32 %v266, %v267
        %276 = vadd.xlane.f32.xlu0 %v275
        %v277 = vpop.xlane.xlu0 %276
        %v278 = vadd.f32 %v268, %v269
        %279 = vadd.xlane.f32.xlu0 %v278
        %v280 = vpop.xlane.xlu0 %279
        %v281 = vadd.f32 %v270, %v271
        %282 = vadd.xlane.f32.xlu0 %v281
        %v283 = vpop.xlane.xlu0 %282
        %v284 = vmul.f32 %v264, %v264
        %v285 = vmul.f32 %v265, %v265
        %v286 = vmul.f32 %v266, %v266
        %v287 = vmul.f32 %v267, %v267
        %v288 = vmul.f32 %v268, %v268
        %v289 = vmul.f32 %v269, %v269
        %v290 = vmul.f32 %v270, %v270
        %v291 = vmul.f32 %v271, %v271
        %v292 = vadd.f32 %v284, %v285
        %293 = vadd.xlane.f32.xlu0 %v292
        %v294 = vpop.xlane.xlu0 %293
        %v295 = vadd.f32 %v286, %v287
        %296 = vadd.xlane.f32.xlu0 %v295
        %v297 = vpop.xlane.xlu0 %296
        %v298 = vadd.f32 %v288, %v289
        %299 = vadd.xlane.f32.xlu0 %v298
        %v300 = vpop.xlane.xlu0 %299
        %v301 = vadd.f32 %v290, %v291
        %302 = vadd.xlane.f32.xlu0 %v301
        %v303 = vpop.xlane.xlu0 %302
        %v304 = vmul.f32 %v274, 0.00390625
        %v305 = vmul.f32 %v277, 0.00390625
        %v306 = vmul.f32 %v280, 0.00390625
        %v307 = vmul.f32 %v283, 0.00390625
        %v308 = vmul.f32 %v274, %v304
        %v309 = vmul.f32 %v277, %v305
        %v310 = vmul.f32 %v280, %v306
        %v311 = vmul.f32 %v283, %v307
        %v312 = vsub.f32 %v294, %v308
        %v313 = vsub.f32 %v297, %v309
        %v314 = vsub.f32 %v300, %v310
        %v315 = vsub.f32 %v303, %v311
        %v316 = vmul.f32 %v312, 0.003921569
        %v317 = vmul.f32 %v313, 0.003921569
        %v318 = vmul.f32 %v314, 0.003921569
        %v319 = vmul.f32 %v315, 0.003921569
        %v320 = vmax.f32 %v316, 0.0
        %v321 = vmax.f32 %v317, 0.0
        %v322 = vmax.f32 %v318, 0.0
        %v323 = vmax.f32 %v319, 0.0
        %v324 = vadd.f32 %v320, 1e-05
        %v325 = vadd.f32 %v321, 1e-05
        %v326 = vadd.f32 %v322, 1e-05
        %v327 = vadd.f32 %v323, 1e-05
        %v328 = vrsqrt.pop %v324
        %v329 = vmul.f32 %v324, %v328
        %vm330 = vcmp.eq.f32.partialorder %v324, inf
        %v331 = vsel %vm330, %v324, %v329
        %vm332 = vcmp.eq.f32.partialorder %v324, 0.0
        %v333 = vand.u32 %v324, 2147483648
        %v334 = vsel %vm332, %v333, %v331
        %v335 = vrsqrt.pop %v325
        %v336 = vmul.f32 %v325, %v335
        %vm337 = vcmp.eq.f32.partialorder %v325, inf
        %v338 = vsel %vm337, %v325, %v336
        %vm339 = vcmp.eq.f32.partialorder %v325, 0.0
        %v340 = vand.u32 %v325, 2147483648
        %v341 = vsel %vm339, %v340, %v338
        %v342 = vrsqrt.pop %v326
        %v343 = vmul.f32 %v326, %v342
        %vm344 = vcmp.eq.f32.partialorder %v326, inf
        %v345 = vsel %vm344, %v326, %v343
        %vm346 = vcmp.eq.f32.partialorder %v326, 0.0
        %v347 = vand.u32 %v326, 2147483648
        %v348 = vsel %vm346, %v347, %v345
        %v349 = vrsqrt.pop %v327
        %v350 = vmul.f32 %v327, %v349
        %vm351 = vcmp.eq.f32.partialorder %v327, inf
        %v352 = vsel %vm351, %v327, %v350
        %vm353 = vcmp.eq.f32.partialorder %v327, 0.0
        %v354 = vand.u32 %v327, 2147483648
        %v355 = vsel %vm353, %v354, %v352
        %v356 = vadd.f32 %v256, %v257
        %357 = vadd.xlane.f32.xlu0 %v356
        %v358 = vpop.xlane.xlu0 %357
        %v359 = vadd.f32 %v258, %v259
        %360 = vadd.xlane.f32.xlu0 %v359
        %v361 = vpop.xlane.xlu0 %360
        %v362 = vadd.f32 %v260, %v261
        %363 = vadd.xlane.f32.xlu0 %v362
        %v364 = vpop.xlane.xlu0 %363
        %v365 = vadd.f32 %v262, %v263
        %366 = vadd.xlane.f32.xlu0 %v365
        %v367 = vpop.xlane.xlu0 %366
        %v368 = vmul.f32 %v256, %v256
        %v369 = vmul.f32 %v257, %v257
        %v370 = vmul.f32 %v258, %v258
        %v371 = vmul.f32 %v259, %v259
        %v372 = vmul.f32 %v260, %v260
        %v373 = vmul.f32 %v261, %v261
        %v374 = vmul.f32 %v262, %v262
        %v375 = vmul.f32 %v263, %v263
        %v376 = vadd.f32 %v368, %v369
        %377 = vadd.xlane.f32.xlu0 %v376
        %v378 = vpop.xlane.xlu0 %377
        %v379 = vadd.f32 %v370, %v371
        %380 = vadd.xlane.f32.xlu0 %v379
        %v381 = vpop.xlane.xlu0 %380
        %v382 = vadd.f32 %v372, %v373
        %383 = vadd.xlane.f32.xlu0 %v382
        %v384 = vpop.xlane.xlu0 %383
        %v385 = vadd.f32 %v374, %v375
        %386 = vadd.xlane.f32.xlu0 %v385
        %v387 = vpop.xlane.xlu0 %386
        %v388 = vmul.f32 %v358, 0.00390625
        %v389 = vmul.f32 %v361, 0.00390625
        %v390 = vmul.f32 %v364, 0.00390625
        %v391 = vmul.f32 %v367, 0.00390625
        %v392 = vmul.f32 %v358, %v388
        %v393 = vmul.f32 %v361, %v389
        %v394 = vmul.f32 %v364, %v390
        %v395 = vmul.f32 %v367, %v391
        %v396 = vsub.f32 %v378, %v392
        %v397 = vsub.f32 %v381, %v393
        %v398 = vsub.f32 %v384, %v394
        %v399 = vsub.f32 %v387, %v395
        %v400 = vmul.f32 %v396, 0.003921569
        %v401 = vmul.f32 %v397, 0.003921569
        %v402 = vmul.f32 %v398, 0.003921569
        %v403 = vmul.f32 %v399, 0.003921569
        %v404 = vmax.f32 %v400, 0.0
        %v405 = vmax.f32 %v401, 0.0
        %v406 = vmax.f32 %v402, 0.0
        %v407 = vmax.f32 %v403, 0.0
        %v408 = vadd.f32 %v404, 1e-05
        %v409 = vadd.f32 %v405, 1e-05
        %v410 = vadd.f32 %v406, 1e-05
        %v411 = vadd.f32 %v407, 1e-05
        %v412 = vrsqrt.pop %v408
        %v413 = vrsqrt.pop %v409
        %v414 = vrsqrt.pop %v410
        %v415 = vrsqrt.pop %v411
        %v416 = vld [vmem:[%s2] sm:$0xff]
        %v417 = vld [vmem:[%s2 + $0x8] sm:$0xff]
        %v418 = vld [vmem:[%s2 + $0x10] sm:$0xff]
        %v419 = vld [vmem:[%s2 + $0x18] sm:$0xff]
        %v420 = vld [vmem:[%s3] sm:$0xff]
        %v421 = vld [vmem:[%s3 + $0x8] sm:$0xff]
        %v422 = vld [vmem:[%s3 + $0x10] sm:$0xff]
        %v423 = vld [vmem:[%s3 + $0x18] sm:$0xff]
        %v424 = vlaneseq
        %v425 = vand.u32 %v424, 127
        %vm426 = vcmp.lt.s32.totalorder %v425, 2
        %v427 = vsel %vm426, %v304, %v334
        %v428 = vsel %vm426, %v305, %v341
        %v429 = vsel %vm426, %v306, %v348
        %v430 = vsel %vm426, %v307, %v355
        %v431 = vmul.f32 %v416, %v427
        %v432 = vmul.f32 %v417, %v428
        %v433 = vmul.f32 %v418, %v429
        %v434 = vmul.f32 %v419, %v430
        %vm435 = vcmask 31744
        %v436 = vsel %vm435, %v431, 0.0
        %v437 = vsel %vm435, %v432, 0.0
        %v438 = vadd.f32 %v436, %v437
        %v439 = vsel %vm435, %v433, 0.0
        %v440 = vadd.f32 %v438, %v439
        %v441 = vsel %vm435, %v434, 0.0
        %v442 = vadd.f32 %v440, %v441
        %v443 = vrot.slane %v442, 4
        %v444 = vadd.f32 %v442, %v443
        %v445 = vrot.slane %v444, 2
        %v446 = vadd.f32 %v444, %v445
        %v447 = vrot.slane %v446, 1
        %v448 = vadd.f32 %v446, %v447
        %v449 = vmax.f32 %v448, 0.0
        %v450 = vmul.f32 %v420, %v449
        %v451 = vmul.f32 %v421, %v449
        %v452 = vmul.f32 %v422, %v449
        %v453 = vmul.f32 %v423, %v449
        %v454 = vsel %vm426, %v450, 0.0
        %v455 = vsel %vm426, %v451, 0.0
        %v456 = vsel %vm426, %v452, 0.0
        %v457 = vsel %vm426, %v453, 0.0
        %v458 = vsel %vm435, %v454, 0.0
        %459 = vadd.xlane.f32.xlu0 %v458
        %v460 = vpop.xlane.xlu0 %459
        %v461 = vsel %vm435, %v455, 0.0
        %462 = vadd.xlane.f32.xlu0 %v461
        %v463 = vpop.xlane.xlu0 %462
        %v464 = vsel %vm435, %v456, 0.0
        %465 = vadd.xlane.f32.xlu0 %v464
        %v466 = vpop.xlane.xlu0 %465
        %v467 = vsel %vm435, %v457, 0.0
        %468 = vadd.xlane.f32.xlu0 %v467
        %v469 = vpop.xlane.xlu0 %468
        %v470 = vsel %vm426, 0.0, %v450
        %v471 = vsel %vm426, 0.0, %v451
        %v472 = vsel %vm426, 0.0, %v452
        %v473 = vsel %vm426, 0.0, %v453
        %v474 = vsel %vm435, %v470, 0.0
        %475 = vadd.xlane.f32.xlu0 %v474
        %v476 = vpop.xlane.xlu0 %475
        %v477 = vsel %vm435, %v471, 0.0
        %478 = vadd.xlane.f32.xlu0 %v477
        %v479 = vpop.xlane.xlu0 %478
        %v480 = vsel %vm435, %v472, 0.0
        %481 = vadd.xlane.f32.xlu0 %v480
        %v482 = vpop.xlane.xlu0 %481
        %v483 = vsel %vm435, %v473, 0.0
        %484 = vadd.xlane.f32.xlu0 %v483
        %v485 = vpop.xlane.xlu0 %484
        %v486 = vmul.f32 %v476, %v412
        %v487 = vmul.f32 %v479, %v413
        %v488 = vmul.f32 %v482, %v414
        %v489 = vmul.f32 %v485, %v415
        %v490 = vmul.f32 %v388, %v486
        %v491 = vmul.f32 %v389, %v487
        %v492 = vmul.f32 %v390, %v488
        %v493 = vmul.f32 %v391, %v489
        %v494 = vsub.f32 %v460, %v490
        %v495 = vsub.f32 %v463, %v491
        %v496 = vsub.f32 %v466, %v492
        %v497 = vsub.f32 %v469, %v493
        %v498 = vmul.f32 %v256, %v486
        %v499 = vmul.f32 %v257, %v486
        %v500 = vmul.f32 %v258, %v487
        %v501 = vmul.f32 %v259, %v487
        %v502 = vmul.f32 %v260, %v488
        %v503 = vmul.f32 %v261, %v488
        %v504 = vmul.f32 %v262, %v489
        %v505 = vmul.f32 %v263, %v489
        %v506 = vadd.f32 %v498, %v494
        %v507 = vadd.f32 %v499, %v494
        %v508 = vadd.f32 %v500, %v495
        %v509 = vadd.f32 %v501, %v495
        %v510 = vadd.f32 %v502, %v496
        %v511 = vadd.f32 %v503, %v496
        %v512 = vadd.f32 %v504, %v497
        %v513 = vadd.f32 %v505, %v497
        %514 = vst [vmem:[%s255] sm:$0xff] %v506
        %515 = vst [vmem:[%s255 + $0x8] sm:$0xff] %v507
        %516 = vst [vmem:[%s255 + $0x10] sm:$0xff] %v508
        %517 = vst [vmem:[%s255 + $0x18] sm:$0xff] %v509
        %518 = vst [vmem:[%s255 + $0x20] sm:$0xff] %v510
        %519 = vst [vmem:[%s255 + $0x28] sm:$0xff] %v511
        %520 = vst [vmem:[%s255 + $0x30] sm:$0xff] %v512
        %521 = vst [vmem:[%s255 + $0x38] sm:$0xff] %v513
        %s522 = sand.u32 %s126, 1
        %s523 = scalar_lea.sflag [#allocation4], %s522
        %s524 = sand.u32 %s126, 1
        %s525 = smul.addr %s524, 64
        %s526 = scalar_lea.vmem [#allocation7], %s525
        // Predicated region
        $region45: #{tpu_custom_call.1} parent=35 // pred_check
          %p527 = pneg %p136
        $region46: #{tpu_custom_call.1} parent=35 // pred_check_branch
          %529 = sbr.rel (%p527) target = $region48
        $region47: #{tpu_custom_call.1} parent=35 // pred_region
          %s531 = ssub.s32 1024, 1024
          %532 = vsyncadd %s523, %s531
          %s533 = smul.addr %s24, 8
          %s534 = smul.addr %s533, 128
          %s535 = scalar_lea.hbm %s4, %s534
          %s536 = sshll.u32 %s526, 4
          %s537 = int_to_ptr.vmem [resolvable:$true] %s536
          %542 = dma.vmem_to_hbm [thread:$0]  %s537, 1024, %s535, %s523, 256, 256, 16
        $region48: #{tpu_custom_call.1} parent=35 // pred_fallthru
          _
      $region36: #{tpu_custom_call.1} parent=5 // pred_fallthru
        _
      %p543 = scmp.le.s32.totalorder 2, %s19
      // Predicated region
      $region49: #{tpu_custom_call.1} parent=5 // pred_check
        %p544 = pneg %p543
      $region50: #{tpu_custom_call.1} parent=5 // pred_check_branch
        %546 = sbr.rel (%p544) target = $region52
      $region51: #{tpu_custom_call.1} parent=5 // pred_region
        %s547 = ssub.s32 %s19, 2
        // Predicated region
        $region53: #{tpu_custom_call.1} parent=51 // pred_check
          %p548 = pneg %p142
        $region54: #{tpu_custom_call.1} parent=51 // pred_check_branch
          %550 = sbr.rel (%p548) target = $region56
        $region55: #{tpu_custom_call.1} parent=51 // pred_region
          %s551 = sand.u32 %s127, 1
          %s552 = scalar_lea.sflag [#allocation4], %s551
          %s553 = sand.u32 %s127, 1
          %s554 = smul.addr %s553, 64
          %s555 = scalar_lea.vmem [#allocation7], %s554
          %556 = dma.done %s552, 1024
        $region56: #{tpu_custom_call.1} parent=51 // pred_fallthru
          _
      $region52: #{tpu_custom_call.1} parent=5 // pred_fallthru
        _
    $region6: #{tpu_custom_call.1} parent=1 // loop_footer
      %s23 = sadd.s32 1, %s19
    $region7: #{tpu_custom_call.1} parent=1 // loop_footer_branch
      %18 = sbr.rel target = $region3
    $region8: #{tpu_custom_call.1} parent=1 // loop_exit
      _
    %557 = vsyncpa [#allocation3], 1
    %s558 = scalar_lea.sflag [#allocation3], 1
    %559 = vsyncpa %s558, 1
    %560 = vsyncpa [#allocation6], 1
    %s561 = scalar_lea.sflag [#allocation6], 1
    %562 = vsyncpa %s561, 1
    %563 = vsyncpa [#allocation4], 1
    %s564 = scalar_lea.sflag [#allocation4], 1
    %565 = vsyncpa %s564, 1

</llo_original>
